<compile_context>
chip_gen: v6e
topology: v6e:2x2x1
jax: 0.10.0
libtpu: 0.0.40
codegen_flags: <defaults>
</compile_context>

<pallas_src>
import functools

import jax
import jax.numpy as jnp
from jax import lax
from jax.experimental import pallas as pl
from jax.experimental.pallas import tpu as pltpu

_DELTA = 0.7  # fixed by the module spec: F.huber_loss(..., delta=0.7)


def _round_up(x, m):
    return -(-x // m) * m


def _mloss_partial_kernel(x_ref, y_ref, out_ref, *,
                          rows, tile_rows, inner_steps, slab, delta):
    """Accumulate per-core partial sums into out_ref, shape (6, 8, lanes).

    out_ref[0]=sum|x-y|, [1]=sum huber(x-y), [2]=sum x, [3]=sum x^2,
    [4]=sum y, [5]=sum y^2 - each kept as an (8,128) slab of lane/sublane
    partials; the single cross-lane reduction and the eta/variance combine
    happen in the JAX wrapper.
    """
    lanes = x_ref.shape[1]
    c = pl.program_id(0)
    s = pl.program_id(1)

    @pl.when(s == 0)
    def _():
        out_ref[...] = jnp.zeros_like(out_ref)

    b = c * inner_steps + s          # virtual (unclamped) row-block index
    row0 = b * tile_rows             # first global row covered by this block
    nslabs = tile_rows // slab
    unroll = min(4, nslabs)

    def accumulate(masked):
        # Hoisted out of the loop (JAX does not CSE broadcast_in_dim).
        iota = (lax.broadcasted_iota(jnp.int32, (slab, lanes), 0)
                if masked else None)
        valid = rows - row0 if masked else None   # dynamic scalar

        def body(i, carry):
            a_ad, a_hu, a_x, a_xx, a_y, a_yy = carry
            r0 = pl.multiple_of(i * slab, slab)
            xs = x_ref[pl.ds(r0, slab), :].astype(jnp.float32)
            ys = y_ref[pl.ds(r0, slab), :].astype(jnp.float32)
            if masked:
                m = iota < (valid - r0)            # row-validity mask
                xs = jnp.where(m, xs, 0.0)
                ys = jnp.where(m, ys, 0.0)
            d = xs - ys
            ad = jnp.abs(d)
            # Branch-free Huber: c = min(|d|,delta); huber = c*(|d| - 0.5*c).
            cc = jnp.minimum(ad, delta)
            hu = cc * (ad - 0.5 * cc)

            def fold(v):
                # (slab, lanes) -> (slab//8, 8, lanes); sum over leading axis
                # is plain VPU adds, result is one vreg-shaped (8, lanes) slab.
                return jnp.sum(v.reshape(slab // 8, 8, lanes), axis=0)

            return (a_ad + fold(ad), a_hu + fold(hu),
                    a_x + fold(xs), a_xx + fold(xs * xs),
                    a_y + fold(ys), a_yy + fold(ys * ys))

        init = tuple(jnp.zeros((8, lanes), jnp.float32) for _ in range(6))
        res = lax.fori_loop(0, nslabs, body, init, unroll=unroll)
        for j in range(6):
            out_ref[j] += res[j]

    is_full = (row0 + tile_rows) <= rows

    @pl.when(is_full)
    def _():
        accumulate(masked=False)          # fast path: no per-element mask

    @pl.when(jnp.logical_not(is_full))
    def _():
        accumulate(masked=True)           # runs for <= 1 partial + 1 empty block


def mloss_pallas(inp, target, eta1, eta2, eta3, *, delta=_DELTA,
                 max_tile_rows=8192, lanes=128, slab_rows=32):
    assert inp.shape == target.shape, (inp.shape, target.shape)
    n_total = int(inp.size)

    xf = inp.reshape(-1)
    yf = target.reshape(-1)

    # Lane alignment only: zero-pad to the next multiple of 128 (zeros add 0 to
    # every partial sum; means divide by the true n_total).  For 128-multiple
    # sizes (the common case) this is a free metadata reshape, no copy.
    # TODO(synk): a 1D pl.ANY ref + manual tail DMA would avoid the copy for
    # ragged (non-128-multiple) sizes as well.
    pad = (-n_total) % lanes
    if pad:
        xf = jnp.pad(xf, (0, pad))
        yf = jnp.pad(yf, (0, pad))
    rows = (n_total + pad) // lanes
    x2 = xf.reshape(rows, lanes)
    y2 = yf.reshape(rows, lanes)

    # Tile: up to 8192 rows -> 4 MiB f32 per input per buffer, 16 MiB of
    # double-buffered inputs; within the raised 48 MiB scoped-VMEM limit on
    # every chip and with headroom on v7x's 64 MiB physical VMEM.
    tile_rows = min(max_tile_rows, _round_up(rows, 8))
    slab = slab_rows
    while tile_rows % slab:
        slab //= 2            # tile_rows is a multiple of 8 -> stops at >= 8

    nblocks = -(-rows // tile_rows)
    num_cores = 2 if nblocks >= 2 else 1           # v7x dual-TensorCore split
    inner_steps = -(-nblocks // num_cores)

    def in_map(c, s):
        # Clamp so the (at most one) virtual block past the end re-reads the
        # last real block; the kernel masks its contribution to zero.
        return (jnp.minimum(c * inner_steps + s, nblocks - 1), 0)

    kernel = functools.partial(
        _mloss_partial_kernel,
        rows=rows, tile_rows=tile_rows, inner_steps=inner_steps,
        slab=slab, delta=float(delta))

    partials = pl.pallas_call(
        kernel,
        out_shape=jax.ShapeDtypeStruct((num_cores, 6, 8, lanes), jnp.float32),
        grid_spec=pltpu.PrefetchScalarGridSpec(
            num_scalar_prefetch=0,
            grid=(num_cores, inner_steps),
            in_specs=[
                pl.BlockSpec((tile_rows, lanes), in_map),
                pl.BlockSpec((tile_rows, lanes), in_map),
            ],
            out_specs=pl.BlockSpec((None, 6, 8, lanes),
                                   lambda c, s: (c, 0, 0, 0)),
        ),
        compiler_params=pltpu.CompilerParams(
            dimension_semantics=("parallel", "arbitrary"),
            vmem_limit_bytes=48 * 1024 * 1024),
    )(x2, y2)

    # Final combine in plain JAX: trivially cheap, keeps hyper-parameters out
    # of the kernel (no Mosaic recompile on eta changes) and removes the
    # one-time in-kernel XLU/scalar tail.
    sums = jnp.sum(partials, axis=(0, 2, 3))        # (6,) f32
    n = jnp.float32(n_total)
    l1_mean = sums[0] / n
    huber_mean = sums[1] / n
    # torch.var default: unbiased (N-1).  Single-pass sum-of-squares in f32 can
    # cancel for huge tensors with large mean (documented caveat); n==1 yields
    # inf/nan like torch's nan-with-warning.
    var_x = (sums[3] - sums[2] * sums[2] / n) / (n - 1.0)
    var_y = (sums[5] - sums[4] * sums[4] / n) / (n - 1.0)
    loss3 = (var_x - var_y) * (var_x - var_y)
    return eta1 * l1_mean + eta2 * huber_mean + eta3 * loss3


def mloss_ref(inp, target, eta1, eta2, eta3, delta=_DELTA):
    x = inp.astype(jnp.float32)
    y = target.astype(jnp.float32)
    d = x - y
    ad = jnp.abs(d)
    loss1 = jnp.mean(ad)
    huber = jnp.where(ad < delta, 0.5 * d * d, delta * (ad - 0.5 * delta))
    loss2 = jnp.mean(huber)
    loss3 = (jnp.var(x, ddof=1) - jnp.var(y, ddof=1)) ** 2
    return eta1 * loss1 + eta2 * loss2 + eta3 * loss3


if __name__ == "__main__":
    # Module "parameters": eta1, eta2, eta3.
    eta1, eta2, eta3 = 1.0, 0.5, 0.25

    key = jax.random.PRNGKey(0)
    k1, k2 = jax.random.split(key)
    # NCHW-shaped prediction / target tensors (flattened inside the wrapper).
    shape = (2, 4, 16, 16)
    x = jax.random.normal(k1, shape, dtype=jnp.float32)
    y = jax.random.normal(k2, shape, dtype=jnp.float32) * 0.8 + 0.1

    loss = mloss_pallas(x, y, eta1, eta2, eta3)
    loss = jax.block_until_ready(loss)

    ref = mloss_ref(x, y, eta1, eta2, eta3)
    assert jnp.allclose(loss, ref, rtol=1e-5, atol=1e-5), (loss, ref)

    print("KERNEL_OK")
</pallas_src>

<mosaic_0001>
module attributes {stable_mosaic.version = 11 : i64} {
  func.func @_mloss_partial_kernel(%arg0: i32, %arg1: i32, %arg2: memref<16x128xf32, #tpu.memory_space<vmem>>, %arg3: memref<16x128xf32, #tpu.memory_space<vmem>>, %arg4: memref<1x6x8x128xf32, #tpu.memory_space<vmem>>) attributes {dimension_semantics = [#tpu.dimension_semantics<parallel>, #tpu.dimension_semantics<arbitrary>], iteration_bounds = array<i64: 1, 1>, scalar_prefetch = 0 : i64, scratch_operands = 0 : i64, tpu.core_type = #tpu.core_type<tc>, window_params = [{transform_indices = @transform_0, window_bounds = array<i64: 16, 128>}, {transform_indices = @transform_1, window_bounds = array<i64: 16, 128>}, {transform_indices = @transform_2, window_bounds = array<i64: 1, 6, 8, 128>}]} {
    %c0_i32 = arith.constant 0 : i32
    %0 = arith.cmpi eq, %arg1, %c0_i32 : i32
    %1 = arith.extui %0 : i1 to i32
    %c0_i32_0 = arith.constant 0 : i32
    %2 = arith.cmpi ne, %1, %c0_i32_0 : i32
    scf.if %2 {
      %cst = arith.constant 0.000000e+00 : f32
      %13 = vector.broadcast %cst : f32 to vector<6x8x128xf32>
      %c0 = arith.constant 0 : index
      %c0_5 = arith.constant 0 : index
      %c0_6 = arith.constant 0 : index
      %c0_7 = arith.constant 0 : index
      %14 = vector.load %arg4[%c0, %c0_5, %c0_6, %c0_7] : memref<1x6x8x128xf32, #tpu.memory_space<vmem>>, vector<1x6x8x128xf32>
      %15 = vector.shape_cast %14 : vector<1x6x8x128xf32> to vector<6x8x128xf32>
      %16 = vector.shape_cast %13 : vector<6x8x128xf32> to vector<1x6x8x128xf32>
      tpu.vector_store %arg4[%c0, %c0_5, %c0_6, %c0_7], %16 {strides = array<i32>} : memref<1x6x8x128xf32, #tpu.memory_space<vmem>>, vector<1x6x8x128xf32>,
    } else {
    }
    %c1_i32 = arith.constant 1 : i32
    %3 = arith.muli %arg0, %c1_i32 : i32
    %4 = arith.addi %3, %arg1 : i32
    %c16_i32 = arith.constant 16 : i32
    %5 = arith.muli %4, %c16_i32 : i32
    %c16_i32_1 = arith.constant 16 : i32
    %6 = arith.addi %5, %c16_i32_1 : i32
    %c16_i32_2 = arith.constant 16 : i32
    %7 = arith.cmpi sle, %6, %c16_i32_2 : i32
    %8 = arith.extui %7 : i1 to i32
    %c0_i32_3 = arith.constant 0 : i32
    %9 = arith.cmpi ne, %8, %c0_i32_3 : i32
    scf.if %9 {
      %cst = arith.constant 0.000000e+00 : f32
      %13 = vector.broadcast %cst : f32 to vector<8x128xf32>
      %cst_5 = arith.constant 0.000000e+00 : f32
      %14 = vector.broadcast %cst_5 : f32 to vector<8x128xf32>
      %cst_6 = arith.constant 0.000000e+00 : f32
      %15 = vector.broadcast %cst_6 : f32 to vector<8x128xf32>
      %cst_7 = arith.constant 0.000000e+00 : f32
      %16 = vector.broadcast %cst_7 : f32 to vector<8x128xf32>
      %cst_8 = arith.constant 0.000000e+00 : f32
      %17 = vector.broadcast %cst_8 : f32 to vector<8x128xf32>
      %cst_9 = arith.constant 0.000000e+00 : f32
      %18 = vector.broadcast %cst_9 : f32 to vector<8x128xf32>
      %c0_i32_10 = arith.constant 0 : i32
      %c16_i32_11 = arith.constant 16 : i32
      %19 = arith.muli %c0_i32_10, %c16_i32_11 : i32
      %20 = tpu.assume_multiple %19, 16 : i32
      %21 = arith.index_cast %20 : i32 to index
      %c0 = arith.constant 0 : index
      %22 = vector.load %arg2[%21, %c0] : memref<16x128xf32, #tpu.memory_space<vmem>>, vector<16x128xf32>
      %23 = arith.index_cast %20 : i32 to index
      %c0_12 = arith.constant 0 : index
      %24 = vector.load %arg3[%23, %c0_12] : memref<16x128xf32, #tpu.memory_space<vmem>>, vector<16x128xf32>
      %25 = arith.subf %22, %24 : vector<16x128xf32>
      %26 = math.absf %25 : vector<16x128xf32>
      %cst_13 = arith.constant 0.699999988 : f32
      %27 = vector.broadcast %cst_13 : f32 to vector<16x128xf32>
      %28 = arith.minimumf %26, %27 : vector<16x128xf32>
      %cst_14 = arith.constant 5.000000e-01 : f32
      %29 = vector.broadcast %cst_14 : f32 to vector<16x128xf32>
      %30 = arith.mulf %29, %28 : vector<16x128xf32>
      %31 = arith.subf %26, %30 : vector<16x128xf32>
      %32 = arith.mulf %28, %31 : vector<16x128xf32>
      %33 = vector.shape_cast %26 : vector<16x128xf32> to vector<2x8x128xf32>
      %cst_15 = arith.constant dense<0.000000e+00> : vector<8x128xf32>
      %34 = vector.multi_reduction <add>, %33, %cst_15 [0] : vector<2x8x128xf32> to vector<8x128xf32>
      %35 = arith.addf %13, %34 : vector<8x128xf32>
      %36 = vector.shape_cast %32 : vector<16x128xf32> to vector<2x8x128xf32>
      %cst_16 = arith.constant dense<0.000000e+00> : vector<8x128xf32>
      %37 = vector.multi_reduction <add>, %36, %cst_16 [0] : vector<2x8x128xf32> to vector<8x128xf32>
      %38 = arith.addf %14, %37 : vector<8x128xf32>
      %39 = vector.shape_cast %22 : vector<16x128xf32> to vector<2x8x128xf32>
      %cst_17 = arith.constant dense<0.000000e+00> : vector<8x128xf32>
      %40 = vector.multi_reduction <add>, %39, %cst_17 [0] : vector<2x8x128xf32> to vector<8x128xf32>
      %41 = arith.addf %15, %40 : vector<8x128xf32>
      %42 = arith.mulf %22, %22 : vector<16x128xf32>
      %43 = vector.shape_cast %42 : vector<16x128xf32> to vector<2x8x128xf32>
      %cst_18 = arith.constant dense<0.000000e+00> : vector<8x128xf32>
      %44 = vector.multi_reduction <add>, %43, %cst_18 [0] : vector<2x8x128xf32> to vector<8x128xf32>
      %45 = arith.addf %16, %44 : vector<8x128xf32>
      %46 = vector.shape_cast %24 : vector<16x128xf32> to vector<2x8x128xf32>
      %cst_19 = arith.constant dense<0.000000e+00> : vector<8x128xf32>
      %47 = vector.multi_reduction <add>, %46, %cst_19 [0] : vector<2x8x128xf32> to vector<8x128xf32>
      %48 = arith.addf %17, %47 : vector<8x128xf32>
      %49 = arith.mulf %24, %24 : vector<16x128xf32>
      %50 = vector.shape_cast %49 : vector<16x128xf32> to vector<2x8x128xf32>
      %cst_20 = arith.constant dense<0.000000e+00> : vector<8x128xf32>
      %51 = vector.multi_reduction <add>, %50, %cst_20 [0] : vector<2x8x128xf32> to vector<8x128xf32>
      %52 = arith.addf %18, %51 : vector<8x128xf32>
      %c1_i32_21 = arith.constant 1 : i32
      %c0_22 = arith.constant 0 : index
      %c0_23 = arith.constant 0 : index
      %c0_24 = arith.constant 0 : index
      %c0_25 = arith.constant 0 : index
      %53 = vector.load %arg4[%c0_22, %c0_23, %c0_24, %c0_25] : memref<1x6x8x128xf32, #tpu.memory_space<vmem>>, vector<1x1x8x128xf32>
      %54 = vector.shape_cast %53 : vector<1x1x8x128xf32> to vector<8x128xf32>
      %55 = arith.addf %54, %35 : vector<8x128xf32>
      %c0_26 = arith.constant 0 : index
      %c0_27 = arith.constant 0 : index
      %c0_28 = arith.constant 0 : index
      %c0_29 = arith.constant 0 : index
      %56 = vector.load %arg4[%c0_26, %c0_27, %c0_28, %c0_29] : memref<1x6x8x128xf32, #tpu.memory_space<vmem>>, vector<1x1x8x128xf32>
      %57 = vector.shape_cast %56 : vector<1x1x8x128xf32> to vector<8x128xf32>
      %58 = vector.shape_cast %55 : vector<8x128xf32> to vector<1x1x8x128xf32>
      tpu.vector_store %arg4[%c0_26, %c0_27, %c0_28, %c0_29], %58 {strides = array<i32>} : memref<1x6x8x128xf32, #tpu.memory_space<vmem>>, vector<1x1x8x128xf32>,
      %c0_30 = arith.constant 0 : index
      %c1 = arith.constant 1 : index
      %c0_31 = arith.constant 0 : index
      %c0_32 = arith.constant 0 : index
      %59 = vector.load %arg4[%c0_30, %c1, %c0_31, %c0_32] : memref<1x6x8x128xf32, #tpu.memory_space<vmem>>, vector<1x1x8x128xf32>
      %60 = vector.shape_cast %59 : vector<1x1x8x128xf32> to vector<8x128xf32>
      %61 = arith.addf %60, %38 : vector<8x128xf32>
      %c0_33 = arith.constant 0 : index
      %c1_34 = arith.constant 1 : index
      %c0_35 = arith.constant 0 : index
      %c0_36 = arith.constant 0 : index
      %62 = vector.load %arg4[%c0_33, %c1_34, %c0_35, %c0_36] : memref<1x6x8x128xf32, #tpu.memory_space<vmem>>, vector<1x1x8x128xf32>
      %63 = vector.shape_cast %62 : vector<1x1x8x128xf32> to vector<8x128xf32>
      %64 = vector.shape_cast %61 : vector<8x128xf32> to vector<1x1x8x128xf32>
      tpu.vector_store %arg4[%c0_33, %c1_34, %c0_35, %c0_36], %64 {strides = array<i32>} : memref<1x6x8x128xf32, #tpu.memory_space<vmem>>, vector<1x1x8x128xf32>,
      %c0_37 = arith.constant 0 : index
      %c2 = arith.constant 2 : index
      %c0_38 = arith.constant 0 : index
      %c0_39 = arith.constant 0 : index
      %65 = vector.load %arg4[%c0_37, %c2, %c0_38, %c0_39] : memref<1x6x8x128xf32, #tpu.memory_space<vmem>>, vector<1x1x8x128xf32>
      %66 = vector.shape_cast %65 : vector<1x1x8x128xf32> to vector<8x128xf32>
      %67 = arith.addf %66, %41 : vector<8x128xf32>
      %c0_40 = arith.constant 0 : index
      %c2_41 = arith.constant 2 : index
      %c0_42 = arith.constant 0 : index
      %c0_43 = arith.constant 0 : index
      %68 = vector.load %arg4[%c0_40, %c2_41, %c0_42, %c0_43] : memref<1x6x8x128xf32, #tpu.memory_space<vmem>>, vector<1x1x8x128xf32>
      %69 = vector.shape_cast %68 : vector<1x1x8x128xf32> to vector<8x128xf32>
      %70 = vector.shape_cast %67 : vector<8x128xf32> to vector<1x1x8x128xf32>
      tpu.vector_store %arg4[%c0_40, %c2_41, %c0_42, %c0_43], %70 {strides = array<i32>} : memref<1x6x8x128xf32, #tpu.memory_space<vmem>>, vector<1x1x8x128xf32>,
      %c0_44 = arith.constant 0 : index
      %c3 = arith.constant 3 : index
      %c0_45 = arith.constant 0 : index
      %c0_46 = arith.constant 0 : index
      %71 = vector.load %arg4[%c0_44, %c3, %c0_45, %c0_46] : memref<1x6x8x128xf32, #tpu.memory_space<vmem>>, vector<1x1x8x128xf32>
      %72 = vector.shape_cast %71 : vector<1x1x8x128xf32> to vector<8x128xf32>
      %73 = arith.addf %72, %45 : vector<8x128xf32>
      %c0_47 = arith.constant 0 : index
      %c3_48 = arith.constant 3 : index
      %c0_49 = arith.constant 0 : index
      %c0_50 = arith.constant 0 : index
      %74 = vector.load %arg4[%c0_47, %c3_48, %c0_49, %c0_50] : memref<1x6x8x128xf32, #tpu.memory_space<vmem>>, vector<1x1x8x128xf32>
      %75 = vector.shape_cast %74 : vector<1x1x8x128xf32> to vector<8x128xf32>
      %76 = vector.shape_cast %73 : vector<8x128xf32> to vector<1x1x8x128xf32>
      tpu.vector_store %arg4[%c0_47, %c3_48, %c0_49, %c0_50], %76 {strides = array<i32>} : memref<1x6x8x128xf32, #tpu.memory_space<vmem>>, vector<1x1x8x128xf32>,
      %c0_51 = arith.constant 0 : index
      %c4 = arith.constant 4 : index
      %c0_52 = arith.constant 0 : index
      %c0_53 = arith.constant 0 : index
      %77 = vector.load %arg4[%c0_51, %c4, %c0_52, %c0_53] : memref<1x6x8x128xf32, #tpu.memory_space<vmem>>, vector<1x1x8x128xf32>
      %78 = vector.shape_cast %77 : vector<1x1x8x128xf32> to vector<8x128xf32>
      %79 = arith.addf %78, %48 : vector<8x128xf32>
      %c0_54 = arith.constant 0 : index
      %c4_55 = arith.constant 4 : index
      %c0_56 = arith.constant 0 : index
      %c0_57 = arith.constant 0 : index
      %80 = vector.load %arg4[%c0_54, %c4_55, %c0_56, %c0_57] : memref<1x6x8x128xf32, #tpu.memory_space<vmem>>, vector<1x1x8x128xf32>
      %81 = vector.shape_cast %80 : vector<1x1x8x128xf32> to vector<8x128xf32>
      %82 = vector.shape_cast %79 : vector<8x128xf32> to vector<1x1x8x128xf32>
      tpu.vector_store %arg4[%c0_54, %c4_55, %c0_56, %c0_57], %82 {strides = array<i32>} : memref<1x6x8x128xf32, #tpu.memory_space<vmem>>, vector<1x1x8x128xf32>,
      %c0_58 = arith.constant 0 : index
      %c5 = arith.constant 5 : index
      %c0_59 = arith.constant 0 : index
      %c0_60 = arith.constant 0 : index
      %83 = vector.load %arg4[%c0_58, %c5, %c0_59, %c0_60] : memref<1x6x8x128xf32, #tpu.memory_space<vmem>>, vector<1x1x8x128xf32>
      %84 = vector.shape_cast %83 : vector<1x1x8x128xf32> to vector<8x128xf32>
      %85 = arith.addf %84, %52 : vector<8x128xf32>
      %c0_61 = arith.constant 0 : index
      %c5_62 = arith.constant 5 : index
      %c0_63 = arith.constant 0 : index
      %c0_64 = arith.constant 0 : index
      %86 = vector.load %arg4[%c0_61, %c5_62, %c0_63, %c0_64] : memref<1x6x8x128xf32, #tpu.memory_space<vmem>>, vector<1x1x8x128xf32>
      %87 = vector.shape_cast %86 : vector<1x1x8x128xf32> to vector<8x128xf32>
      %88 = vector.shape_cast %85 : vector<8x128xf32> to vector<1x1x8x128xf32>
      tpu.vector_store %arg4[%c0_61, %c5_62, %c0_63, %c0_64], %88 {strides = array<i32>} : memref<1x6x8x128xf32, #tpu.memory_space<vmem>>, vector<1x1x8x128xf32>,
    } else {
    }
    %true = arith.constant true
    %10 = arith.xori %7, %true : i1
    %11 = arith.extui %10 : i1 to i32
    %c0_i32_4 = arith.constant 0 : i32
    %12 = arith.cmpi ne, %11, %c0_i32_4 : i32
    scf.if %12 {
      %13 = tpu.iota {dimensions = array<i32: 0>} : vector<16x128xi32>
      %c16_i32_5 = arith.constant 16 : i32
      %14 = arith.subi %c16_i32_5, %5 : i32
      %cst = arith.constant 0.000000e+00 : f32
      %15 = vector.broadcast %cst : f32 to vector<8x128xf32>
      %cst_6 = arith.constant 0.000000e+00 : f32
      %16 = vector.broadcast %cst_6 : f32 to vector<8x128xf32>
      %cst_7 = arith.constant 0.000000e+00 : f32
      %17 = vector.broadcast %cst_7 : f32 to vector<8x128xf32>
      %cst_8 = arith.constant 0.000000e+00 : f32
      %18 = vector.broadcast %cst_8 : f32 to vector<8x128xf32>
      %cst_9 = arith.constant 0.000000e+00 : f32
      %19 = vector.broadcast %cst_9 : f32 to vector<8x128xf32>
      %cst_10 = arith.constant 0.000000e+00 : f32
      %20 = vector.broadcast %cst_10 : f32 to vector<8x128xf32>
      %c0_i32_11 = arith.constant 0 : i32
      %c16_i32_12 = arith.constant 16 : i32
      %21 = arith.muli %c0_i32_11, %c16_i32_12 : i32
      %22 = tpu.assume_multiple %21, 16 : i32
      %23 = arith.index_cast %22 : i32 to index
      %c0 = arith.constant 0 : index
      %24 = vector.load %arg2[%23, %c0] : memref<16x128xf32, #tpu.memory_space<vmem>>, vector<16x128xf32>
      %25 = arith.index_cast %22 : i32 to index
      %c0_13 = arith.constant 0 : index
      %26 = vector.load %arg3[%25, %c0_13] : memref<16x128xf32, #tpu.memory_space<vmem>>, vector<16x128xf32>
      %27 = arith.subi %14, %22 : i32
      %28 = vector.broadcast %27 : i32 to vector<16x128xi32>
      %29 = arith.cmpi slt, %13, %28 : vector<16x128xi32>
      %cst_14 = arith.constant 0.000000e+00 : f32
      %30 = vector.broadcast %cst_14 : f32 to vector<16x128xf32>
      %31 = arith.select %29, %24, %30 : vector<16x128xi1>, vector<16x128xf32>
      %cst_15 = arith.constant 0.000000e+00 : f32
      %32 = vector.broadcast %cst_15 : f32 to vector<16x128xf32>
      %33 = arith.select %29, %26, %32 : vector<16x128xi1>, vector<16x128xf32>
      %34 = arith.subf %31, %33 : vector<16x128xf32>
      %35 = math.absf %34 : vector<16x128xf32>
      %cst_16 = arith.constant 0.699999988 : f32
      %36 = vector.broadcast %cst_16 : f32 to vector<16x128xf32>
      %37 = arith.minimumf %35, %36 : vector<16x128xf32>
      %cst_17 = arith.constant 5.000000e-01 : f32
      %38 = vector.broadcast %cst_17 : f32 to vector<16x128xf32>
      %39 = arith.mulf %38, %37 : vector<16x128xf32>
      %40 = arith.subf %35, %39 : vector<16x128xf32>
      %41 = arith.mulf %37, %40 : vector<16x128xf32>
      %42 = vector.shape_cast %35 : vector<16x128xf32> to vector<2x8x128xf32>
      %cst_18 = arith.constant dense<0.000000e+00> : vector<8x128xf32>
      %43 = vector.multi_reduction <add>, %42, %cst_18 [0] : vector<2x8x128xf32> to vector<8x128xf32>
      %44 = arith.addf %15, %43 : vector<8x128xf32>
      %45 = vector.shape_cast %41 : vector<16x128xf32> to vector<2x8x128xf32>
      %cst_19 = arith.constant dense<0.000000e+00> : vector<8x128xf32>
      %46 = vector.multi_reduction <add>, %45, %cst_19 [0] : vector<2x8x128xf32> to vector<8x128xf32>
      %47 = arith.addf %16, %46 : vector<8x128xf32>
      %48 = vector.shape_cast %31 : vector<16x128xf32> to vector<2x8x128xf32>
      %cst_20 = arith.constant dense<0.000000e+00> : vector<8x128xf32>
      %49 = vector.multi_reduction <add>, %48, %cst_20 [0] : vector<2x8x128xf32> to vector<8x128xf32>
      %50 = arith.addf %17, %49 : vector<8x128xf32>
      %51 = arith.mulf %31, %31 : vector<16x128xf32>
      %52 = vector.shape_cast %51 : vector<16x128xf32> to vector<2x8x128xf32>
      %cst_21 = arith.constant dense<0.000000e+00> : vector<8x128xf32>
      %53 = vector.multi_reduction <add>, %52, %cst_21 [0] : vector<2x8x128xf32> to vector<8x128xf32>
      %54 = arith.addf %18, %53 : vector<8x128xf32>
      %55 = vector.shape_cast %33 : vector<16x128xf32> to vector<2x8x128xf32>
      %cst_22 = arith.constant dense<0.000000e+00> : vector<8x128xf32>
      %56 = vector.multi_reduction <add>, %55, %cst_22 [0] : vector<2x8x128xf32> to vector<8x128xf32>
      %57 = arith.addf %19, %56 : vector<8x128xf32>
      %58 = arith.mulf %33, %33 : vector<16x128xf32>
      %59 = vector.shape_cast %58 : vector<16x128xf32> to vector<2x8x128xf32>
      %cst_23 = arith.constant dense<0.000000e+00> : vector<8x128xf32>
      %60 = vector.multi_reduction <add>, %59, %cst_23 [0] : vector<2x8x128xf32> to vector<8x128xf32>
      %61 = arith.addf %20, %60 : vector<8x128xf32>
      %c1_i32_24 = arith.constant 1 : i32
      %c0_25 = arith.constant 0 : index
      %c0_26 = arith.constant 0 : index
      %c0_27 = arith.constant 0 : index
      %c0_28 = arith.constant 0 : index
      %62 = vector.load %arg4[%c0_25, %c0_26, %c0_27, %c0_28] : memref<1x6x8x128xf32, #tpu.memory_space<vmem>>, vector<1x1x8x128xf32>
      %63 = vector.shape_cast %62 : vector<1x1x8x128xf32> to vector<8x128xf32>
      %64 = arith.addf %63, %44 : vector<8x128xf32>
      %c0_29 = arith.constant 0 : index
      %c0_30 = arith.constant 0 : index
      %c0_31 = arith.constant 0 : index
      %c0_32 = arith.constant 0 : index
      %65 = vector.load %arg4[%c0_29, %c0_30, %c0_31, %c0_32] : memref<1x6x8x128xf32, #tpu.memory_space<vmem>>, vector<1x1x8x128xf32>
      %66 = vector.shape_cast %65 : vector<1x1x8x128xf32> to vector<8x128xf32>
      %67 = vector.shape_cast %64 : vector<8x128xf32> to vector<1x1x8x128xf32>
      tpu.vector_store %arg4[%c0_29, %c0_30, %c0_31, %c0_32], %67 {strides = array<i32>} : memref<1x6x8x128xf32, #tpu.memory_space<vmem>>, vector<1x1x8x128xf32>,
      %c0_33 = arith.constant 0 : index
      %c1 = arith.constant 1 : index
      %c0_34 = arith.constant 0 : index
      %c0_35 = arith.constant 0 : index
      %68 = vector.load %arg4[%c0_33, %c1, %c0_34, %c0_35] : memref<1x6x8x128xf32, #tpu.memory_space<vmem>>, vector<1x1x8x128xf32>
      %69 = vector.shape_cast %68 : vector<1x1x8x128xf32> to vector<8x128xf32>
      %70 = arith.addf %69, %47 : vector<8x128xf32>
      %c0_36 = arith.constant 0 : index
      %c1_37 = arith.constant 1 : index
      %c0_38 = arith.constant 0 : index
      %c0_39 = arith.constant 0 : index
      %71 = vector.load %arg4[%c0_36, %c1_37, %c0_38, %c0_39] : memref<1x6x8x128xf32, #tpu.memory_space<vmem>>, vector<1x1x8x128xf32>
      %72 = vector.shape_cast %71 : vector<1x1x8x128xf32> to vector<8x128xf32>
      %73 = vector.shape_cast %70 : vector<8x128xf32> to vector<1x1x8x128xf32>
      tpu.vector_store %arg4[%c0_36, %c1_37, %c0_38, %c0_39], %73 {strides = array<i32>} : memref<1x6x8x128xf32, #tpu.memory_space<vmem>>, vector<1x1x8x128xf32>,
      %c0_40 = arith.constant 0 : index
      %c2 = arith.constant 2 : index
      %c0_41 = arith.constant 0 : index
      %c0_42 = arith.constant 0 : index
      %74 = vector.load %arg4[%c0_40, %c2, %c0_41, %c0_42] : memref<1x6x8x128xf32, #tpu.memory_space<vmem>>, vector<1x1x8x128xf32>
      %75 = vector.shape_cast %74 : vector<1x1x8x128xf32> to vector<8x128xf32>
      %76 = arith.addf %75, %50 : vector<8x128xf32>
      %c0_43 = arith.constant 0 : index
      %c2_44 = arith.constant 2 : index
      %c0_45 = arith.constant 0 : index
      %c0_46 = arith.constant 0 : index
      %77 = vector.load %arg4[%c0_43, %c2_44, %c0_45, %c0_46] : memref<1x6x8x128xf32, #tpu.memory_space<vmem>>, vector<1x1x8x128xf32>
      %78 = vector.shape_cast %77 : vector<1x1x8x128xf32> to vector<8x128xf32>
      %79 = vector.shape_cast %76 : vector<8x128xf32> to vector<1x1x8x128xf32>
      tpu.vector_store %arg4[%c0_43, %c2_44, %c0_45, %c0_46], %79 {strides = array<i32>} : memref<1x6x8x128xf32, #tpu.memory_space<vmem>>, vector<1x1x8x128xf32>,
      %c0_47 = arith.constant 0 : index
      %c3 = arith.constant 3 : index
      %c0_48 = arith.constant 0 : index
      %c0_49 = arith.constant 0 : index
      %80 = vector.load %arg4[%c0_47, %c3, %c0_48, %c0_49] : memref<1x6x8x128xf32, #tpu.memory_space<vmem>>, vector<1x1x8x128xf32>
      %81 = vector.shape_cast %80 : vector<1x1x8x128xf32> to vector<8x128xf32>
      %82 = arith.addf %81, %54 : vector<8x128xf32>
      %c0_50 = arith.constant 0 : index
      %c3_51 = arith.constant 3 : index
      %c0_52 = arith.constant 0 : index
      %c0_53 = arith.constant 0 : index
      %83 = vector.load %arg4[%c0_50, %c3_51, %c0_52, %c0_53] : memref<1x6x8x128xf32, #tpu.memory_space<vmem>>, vector<1x1x8x128xf32>
      %84 = vector.shape_cast %83 : vector<1x1x8x128xf32> to vector<8x128xf32>
      %85 = vector.shape_cast %82 : vector<8x128xf32> to vector<1x1x8x128xf32>
      tpu.vector_store %arg4[%c0_50, %c3_51, %c0_52, %c0_53], %85 {strides = array<i32>} : memref<1x6x8x128xf32, #tpu.memory_space<vmem>>, vector<1x1x8x128xf32>,
      %c0_54 = arith.constant 0 : index
      %c4 = arith.constant 4 : index
      %c0_55 = arith.constant 0 : index
      %c0_56 = arith.constant 0 : index
      %86 = vector.load %arg4[%c0_54, %c4, %c0_55, %c0_56] : memref<1x6x8x128xf32, #tpu.memory_space<vmem>>, vector<1x1x8x128xf32>
      %87 = vector.shape_cast %86 : vector<1x1x8x128xf32> to vector<8x128xf32>
      %88 = arith.addf %87, %57 : vector<8x128xf32>
      %c0_57 = arith.constant 0 : index
      %c4_58 = arith.constant 4 : index
      %c0_59 = arith.constant 0 : index
      %c0_60 = arith.constant 0 : index
      %89 = vector.load %arg4[%c0_57, %c4_58, %c0_59, %c0_60] : memref<1x6x8x128xf32, #tpu.memory_space<vmem>>, vector<1x1x8x128xf32>
      %90 = vector.shape_cast %89 : vector<1x1x8x128xf32> to vector<8x128xf32>
      %91 = vector.shape_cast %88 : vector<8x128xf32> to vector<1x1x8x128xf32>
      tpu.vector_store %arg4[%c0_57, %c4_58, %c0_59, %c0_60], %91 {strides = array<i32>} : memref<1x6x8x128xf32, #tpu.memory_space<vmem>>, vector<1x1x8x128xf32>,
      %c0_61 = arith.constant 0 : index
      %c5 = arith.constant 5 : index
      %c0_62 = arith.constant 0 : index
      %c0_63 = arith.constant 0 : index
      %92 = vector.load %arg4[%c0_61, %c5, %c0_62, %c0_63] : memref<1x6x8x128xf32, #tpu.memory_space<vmem>>, vector<1x1x8x128xf32>
      %93 = vector.shape_cast %92 : vector<1x1x8x128xf32> to vector<8x128xf32>
      %94 = arith.addf %93, %61 : vector<8x128xf32>
      %c0_64 = arith.constant 0 : index
      %c5_65 = arith.constant 5 : index
      %c0_66 = arith.constant 0 : index
      %c0_67 = arith.constant 0 : index
      %95 = vector.load %arg4[%c0_64, %c5_65, %c0_66, %c0_67] : memref<1x6x8x128xf32, #tpu.memory_space<vmem>>, vector<1x1x8x128xf32>
      %96 = vector.shape_cast %95 : vector<1x1x8x128xf32> to vector<8x128xf32>
      %97 = vector.shape_cast %94 : vector<8x128xf32> to vector<1x1x8x128xf32>
      tpu.vector_store %arg4[%c0_64, %c5_65, %c0_66, %c0_67], %97 {strides = array<i32>} : memref<1x6x8x128xf32, #tpu.memory_space<vmem>>, vector<1x1x8x128xf32>,
    } else {
    }
    return
  }
  func.func @transform_0(%arg0: i32, %arg1: i32) -> (i32, i32) {
    %c1_i32 = arith.constant 1 : i32
    %0 = arith.muli %arg0, %c1_i32 : i32
    %1 = arith.addi %0, %arg1 : i32
    %c0_i32 = arith.constant 0 : i32
    %2 = arith.minsi %1, %c0_i32 : i32
    %c0_i32_0 = arith.constant 0 : i32
    %c0_i32_1 = arith.constant 0 : i32
    return %2, %c0_i32_0 : i32, i32
  }
  func.func @transform_1(%arg0: i32, %arg1: i32) -> (i32, i32) {
    %c1_i32 = arith.constant 1 : i32
    %0 = arith.muli %arg0, %c1_i32 : i32
    %1 = arith.addi %0, %arg1 : i32
    %c0_i32 = arith.constant 0 : i32
    %2 = arith.minsi %1, %c0_i32 : i32
    %c0_i32_0 = arith.constant 0 : i32
    %c0_i32_1 = arith.constant 0 : i32
    return %2, %c0_i32_0 : i32, i32
  }
  func.func @transform_2(%arg0: i32, %arg1: i32) -> (i32, i32, i32, i32) {
    %c0_i32 = arith.constant 0 : i32
    %c0_i32_0 = arith.constant 0 : i32
    %c0_i32_1 = arith.constant 0 : i32
    %c0_i32_2 = arith.constant 0 : i32
    return %arg0, %c0_i32, %c0_i32_0, %c0_i32_1 : i32, i32, i32, i32
  }
}

</mosaic_0001>

<llo_original>
// kernel: tpu_custom_call.1
$region0: #{tpu_custom_call.1}
  #allocation0 [shape = 'u32[]', space=smem, size = 0x4, offset = 0x4, fixed_abs, tag = 'smem constant byte address 0x4 - core index']
  #allocation1 [shape = 'u32[144,128]{1,0:T(1,128)}', space=vmem, size = 0x12000, scoped, tag = 'internal scratch']
  %s0 = inlined_call_operand.hbm [shape: f32[16,128], index: 0, kind: input, shape index: {}]
  %s1 = inlined_call_operand.hbm [shape: f32[16,128], index: 1, kind: input, shape index: {}]
  %s2 = inlined_call_operand.hbm [shape: f32[1,6,8,128], index: 2, kind: output, shape index: {}]
  %s3 = sld [smem:[#allocation0]]
  $region38: #{tpu_custom_call.1} parent=0
    _
  %s5 = ssub.s32 1, %s3
  %s6 = scalar_select 0, %s5, %s3
  $region1: #{tpu_custom_call.1} parent=0
    #allocation2 [shape = 'u8[8192]{0}', space=vmem, size = 0x2000, scoped, tag = 'input window, operand 0, single buffered']
    #allocation3 [shape = 's32[1]{0}', space=sflag, size = 0x4, scoped, tag = 'scoped memory for tpu_custom_call.1']
    #allocation4 [shape = 's32[1]{0}', space=sflag, size = 0x4, scoped, tag = 'scoped memory for tpu_custom_call.1']
    #allocation5 [shape = 'u8[8192]{0}', space=vmem, size = 0x2000, scoped, tag = 'input window, operand 1, single buffered']
    #allocation6 [shape = 's32[1]{0}', space=sflag, size = 0x4, scoped, tag = 'scoped memory for tpu_custom_call.1']
    #allocation7 [shape = 'u8[24576]{0}', space=vmem, size = 0x6000, scoped, tag = 'output window, operand 0, single buffered']
    %7 = vsyncpa [#allocation3], 0
    %8 = vsyncpa [#allocation6], 0
    %9 = vsyncpa [#allocation4], 0
    // Predicated region
    $region2: #{tpu_custom_call.1} parent=1 // pred_check
      _
    $region3: #{tpu_custom_call.1} parent=1 // pred_check_branch
      %11 = sbr.rel (0) target = $region5
    $region4: #{tpu_custom_call.1} parent=1 // pred_region
      %s12 = sadd.s32 0, 0
      %p13 = scmp.lt.s32.totalorder %s12, 0
      %s14 = scalar_select %p13, %s12, 0
      %s15 = smul.u32 2, %s14
      %s17 = ssub.s32 256, 256
      %18 = vsyncadd [#allocation3], %s17
      %s19 = smul.addr %s15, 128
      %s20 = scalar_lea.hbm %s0, %s19
      %s21 = sshll.u32 [#allocation2], 4
      %s22 = int_to_ptr.vmem [resolvable:$true] %s21
      %27 = dma.hbm_to_vmem [thread:$0]  %s20, 256, %s22, [#allocation3], 128, 128, 8
    $region5: #{tpu_custom_call.1} parent=1 // pred_fallthru
      _
    // Predicated region
    $region6: #{tpu_custom_call.1} parent=1 // pred_check
      _
    $region7: #{tpu_custom_call.1} parent=1 // pred_check_branch
      %29 = sbr.rel (0) target = $region9
    $region8: #{tpu_custom_call.1} parent=1 // pred_region
      %s30 = sadd.s32 0, 0
      %p31 = scmp.lt.s32.totalorder %s30, 0
      %s32 = scalar_select %p31, %s30, 0
      %s33 = smul.u32 2, %s32
      %s35 = ssub.s32 256, 256
      %36 = vsyncadd [#allocation6], %s35
      %s37 = smul.addr %s33, 128
      %s38 = scalar_lea.hbm %s1, %s37
      %s39 = sshll.u32 [#allocation5], 4
      %s40 = int_to_ptr.vmem [resolvable:$true] %s39
      %45 = dma.hbm_to_vmem [thread:$0]  %s38, 256, %s40, [#allocation6], 128, 128, 8
    $region9: #{tpu_custom_call.1} parent=1 // pred_fallthru
      _
    // Predicated region
    $region10: #{tpu_custom_call.1} parent=1 // pred_check
      _
    $region11: #{tpu_custom_call.1} parent=1 // pred_check_branch
      %47 = sbr.rel (0) target = $region13
    $region12: #{tpu_custom_call.1} parent=1 // pred_region
      %48 = dma.done [#allocation3], 256
    $region13: #{tpu_custom_call.1} parent=1 // pred_fallthru
      _
    // Predicated region
    $region14: #{tpu_custom_call.1} parent=1 // pred_check
      _
    $region15: #{tpu_custom_call.1} parent=1 // pred_check_branch
      %50 = sbr.rel (0) target = $region17
    $region16: #{tpu_custom_call.1} parent=1 // pred_region
      %51 = dma.done [#allocation6], 256
    $region17: #{tpu_custom_call.1} parent=1 // pred_fallthru
      _
    %s52 = sadd.s32 0, 0
    %p53 = scmp.lt.s32.totalorder %s52, 0
    %s54 = scalar_select %p53, %s52, 0
    %s55 = smul.u32 2, %s54
    %s56 = sadd.s32 0, 0
    %p57 = scmp.lt.s32.totalorder %s56, 0
    %s58 = scalar_select %p57, %s56, 0
    %s59 = smul.u32 2, %s58
    %p60 = scmp.eq.s32.totalorder 0, 0
    // Predicated region
    $region18: #{tpu_custom_call.1} parent=1 // pred_check
      %p61 = pneg %p60
    $region19: #{tpu_custom_call.1} parent=1 // pred_check_branch
      %63 = sbr.rel (%p61) target = $region21
    $region20: #{tpu_custom_call.1} parent=1 // pred_region
      %64 = vst [vmem:[#allocation7] sm:$0xff] 0.0
      %65 = vst [vmem:[#allocation7 + $0x8] sm:$0xff] 0.0
      %66 = vst [vmem:[#allocation7 + $0x10] sm:$0xff] 0.0
      %67 = vst [vmem:[#allocation7 + $0x18] sm:$0xff] 0.0
      %68 = vst [vmem:[#allocation7 + $0x20] sm:$0xff] 0.0
      %69 = vst [vmem:[#allocation7 + $0x28] sm:$0xff] 0.0
    $region21: #{tpu_custom_call.1} parent=1 // pred_fallthru
      _
    %s70 = sadd.s32 0, 0
    %s71 = smul.u32 %s70, 16
    %s72 = sadd.s32 %s71, 16
    %p73 = scmp.le.s32.totalorder %s72, 16
    // Predicated region
    $region22: #{tpu_custom_call.1} parent=1 // pred_check
      %p74 = pneg %p73
    $region23: #{tpu_custom_call.1} parent=1 // pred_check_branch
      %76 = sbr.rel (%p74) target = $region25
    $region24: #{tpu_custom_call.1} parent=1 // pred_region
      %v77 = vld [vmem:[#allocation2] sm:$0xff]
      %v78 = vld [vmem:[#allocation2 + $0x8] sm:$0xff]
      %v79 = vld [vmem:[#allocation5] sm:$0xff]
      %v80 = vld [vmem:[#allocation5 + $0x8] sm:$0xff]
      %v81 = vsub.f32 %v77, %v79
      %v82 = vsub.f32 %v78, %v80
      %v83 = vand.u32 2147483647, %v81
      %v84 = vand.u32 2147483647, %v82
      %v85 = vmin.f32 %v83, 0.7
      %v86 = vmin.f32 %v84, 0.7
      %v87 = vmul.f32 %v85, 0.5
      %v88 = vmul.f32 %v86, 0.5
      %v89 = vsub.f32 %v83, %v87
      %v90 = vsub.f32 %v84, %v88
      %v91 = vmul.f32 %v85, %v89
      %v92 = vmul.f32 %v86, %v90
      %v93 = vadd.f32 %v83, %v84
      %v94 = vadd.f32 %v93, 0.0
      %v95 = vadd.f32 %v91, %v92
      %v96 = vadd.f32 %v95, 0.0
      %v97 = vadd.f32 %v77, %v78
      %v98 = vadd.f32 %v97, 0.0
      %v99 = vmul.f32 %v77, %v77
      %v100 = vmul.f32 %v78, %v78
      %v101 = vadd.f32 %v99, %v100
      %v102 = vadd.f32 %v101, 0.0
      %v103 = vadd.f32 %v79, %v80
      %v104 = vadd.f32 %v103, 0.0
      %v105 = vmul.f32 %v79, %v79
      %v106 = vmul.f32 %v80, %v80
      %v107 = vadd.f32 %v105, %v106
      %v108 = vadd.f32 %v107, 0.0
      %v109 = vld [vmem:[#allocation7] sm:$0xff]
      %v110 = vadd.f32 %v109, %v94
      %111 = vst [vmem:[#allocation7] sm:$0xff] %v110
      %s112 = scalar_lea.vmem [#allocation7], 8
      %v113 = vld [vmem:[%s112] sm:$0xff]
      %v114 = vadd.f32 %v113, %v96
      %115 = vst [vmem:[%s112] sm:$0xff] %v114
      %s116 = scalar_lea.vmem [#allocation7], 16
      %v117 = vld [vmem:[%s116] sm:$0xff]
      %v118 = vadd.f32 %v117, %v98
      %119 = vst [vmem:[%s116] sm:$0xff] %v118
      %s120 = scalar_lea.vmem [#allocation7], 24
      %v121 = vld [vmem:[%s120] sm:$0xff]
      %v122 = vadd.f32 %v121, %v102
      %123 = vst [vmem:[%s120] sm:$0xff] %v122
      %s124 = scalar_lea.vmem [#allocation7], 32
      %v125 = vld [vmem:[%s124] sm:$0xff]
      %v126 = vadd.f32 %v125, %v104
      %127 = vst [vmem:[%s124] sm:$0xff] %v126
      %s128 = scalar_lea.vmem [#allocation7], 40
      %v129 = vld [vmem:[%s128] sm:$0xff]
      %v130 = vadd.f32 %v129, %v108
      %131 = vst [vmem:[%s128] sm:$0xff] %v130
    $region25: #{tpu_custom_call.1} parent=1 // pred_fallthru
      _
    %p132 = scmp.gt.s32.totalorder %s72, 16
    // Predicated region
    $region26: #{tpu_custom_call.1} parent=1 // pred_check
      %p133 = pneg %p132
    $region27: #{tpu_custom_call.1} parent=1 // pred_check_branch
      %135 = sbr.rel (%p133) target = $region29
    $region28: #{tpu_custom_call.1} parent=1 // pred_region
      %v136 = vlaneseq
      %v137 = vshrl.u32 %v136, 7
      %v138 = vadd.s32 %v137, 8
      %s139 = ssub.s32 16, %s71
      %v140 = vld [vmem:[#allocation2] sm:$0xff]
      %v141 = vld [vmem:[#allocation2 + $0x8] sm:$0xff]
      %v142 = vld [vmem:[#allocation5] sm:$0xff]
      %v143 = vld [vmem:[#allocation5 + $0x8] sm:$0xff]
      %s144 = ssub.s32 %s139, 0
      %v145 = vstv %s144
      %vm146 = vcmp.lt.s32.totalorder %v137, %v145
      %vm147 = vcmp.lt.s32.totalorder %v138, %v145
      %v148 = vsel %vm146, %v140, 0.0
      %v149 = vsel %vm147, %v141, 0.0
      %v150 = vsel %vm146, %v142, 0.0
      %v151 = vsel %vm147, %v143, 0.0
      %v152 = vsub.f32 %v148, %v150
      %v153 = vsub.f32 %v149, %v151
      %v154 = vand.u32 2147483647, %v152
      %v155 = vand.u32 2147483647, %v153
      %v156 = vmin.f32 %v154, 0.7
      %v157 = vmin.f32 %v155, 0.7
      %v158 = vmul.f32 %v156, 0.5
      %v159 = vmul.f32 %v157, 0.5
      %v160 = vsub.f32 %v154, %v158
      %v161 = vsub.f32 %v155, %v159
      %v162 = vmul.f32 %v156, %v160
      %v163 = vmul.f32 %v157, %v161
      %v164 = vadd.f32 %v154, %v155
      %v165 = vadd.f32 %v164, 0.0
      %v166 = vadd.f32 %v162, %v163
      %v167 = vadd.f32 %v166, 0.0
      %v168 = vadd.f32 %v148, %v149
      %v169 = vadd.f32 %v168, 0.0
      %v170 = vmul.f32 %v148, %v148
      %v171 = vmul.f32 %v149, %v149
      %v172 = vadd.f32 %v170, %v171
      %v173 = vadd.f32 %v172, 0.0
      %v174 = vadd.f32 %v150, %v151
      %v175 = vadd.f32 %v174, 0.0
      %v176 = vmul.f32 %v150, %v150
      %v177 = vmul.f32 %v151, %v151
      %v178 = vadd.f32 %v176, %v177
      %v179 = vadd.f32 %v178, 0.0
      %v180 = vld [vmem:[#allocation7] sm:$0xff]
      %v181 = vadd.f32 %v180, %v165
      %182 = vst [vmem:[#allocation7] sm:$0xff] %v181
      %s183 = scalar_lea.vmem [#allocation7], 8
      %v184 = vld [vmem:[%s183] sm:$0xff]
      %v185 = vadd.f32 %v184, %v167
      %186 = vst [vmem:[%s183] sm:$0xff] %v185
      %s187 = scalar_lea.vmem [#allocation7], 16
      %v188 = vld [vmem:[%s187] sm:$0xff]
      %v189 = vadd.f32 %v188, %v169
      %190 = vst [vmem:[%s187] sm:$0xff] %v189
      %s191 = scalar_lea.vmem [#allocation7], 24
      %v192 = vld [vmem:[%s191] sm:$0xff]
      %v193 = vadd.f32 %v192, %v173
      %194 = vst [vmem:[%s191] sm:$0xff] %v193
      %s195 = scalar_lea.vmem [#allocation7], 32
      %v196 = vld [vmem:[%s195] sm:$0xff]
      %v197 = vadd.f32 %v196, %v175
      %198 = vst [vmem:[%s195] sm:$0xff] %v197
      %s199 = scalar_lea.vmem [#allocation7], 40
      %v200 = vld [vmem:[%s199] sm:$0xff]
      %v201 = vadd.f32 %v200, %v179
      %202 = vst [vmem:[%s199] sm:$0xff] %v201
    $region29: #{tpu_custom_call.1} parent=1 // pred_fallthru
      _
    // Predicated region
    $region30: #{tpu_custom_call.1} parent=1 // pred_check
      _
    $region31: #{tpu_custom_call.1} parent=1 // pred_check_branch
      %204 = sbr.rel (0) target = $region33
    $region32: #{tpu_custom_call.1} parent=1 // pred_region
      %s206 = ssub.s32 768, 768
      %207 = vsyncadd [#allocation4], %s206
      %s208 = sshll.u32 [#allocation7], 4
      %s209 = int_to_ptr.vmem [resolvable:$true] %s208
      %214 = dma.vmem_to_hbm [thread:$0]  %s209, 768, %s2, [#allocation4], 128, 128, 8
    $region33: #{tpu_custom_call.1} parent=1 // pred_fallthru
      _
    // Predicated region
    $region34: #{tpu_custom_call.1} parent=1 // pred_check
      _
    $region35: #{tpu_custom_call.1} parent=1 // pred_check_branch
      %216 = sbr.rel (0) target = $region37
    $region36: #{tpu_custom_call.1} parent=1 // pred_region
      %217 = dma.done [#allocation4], 768
    $region37: #{tpu_custom_call.1} parent=1 // pred_fallthru
      _
    %218 = vsyncpa [#allocation3], 1
    %219 = vsyncpa [#allocation6], 1
    %220 = vsyncpa [#allocation4], 1

</llo_original>
